<compile_context>
chip_gen: v7x
topology: tpu7x:2x2x1
jax: 0.10.0
libtpu: 0.0.40
codegen_flags: <defaults>
</compile_context>

<pallas_src>
import jax
import jax.numpy as jnp
from jax.experimental import pallas as pl
from jax.experimental.pallas import tpu as pltpu


def _td_conv_kernel(x_ref, w_ref, b_ref, o_ref):
    """Fused conv-as-single-matmul step.

    x_ref: (N_blk, H, 3*(W+2)*Cin)   row-im2col input slab
    w_ref: (3*(W+2)*Cin, W*Cout)     block-Toeplitz weight
    b_ref: (1, W*Cout)               bias tiled over W
    o_ref: (N_blk, H, W*Cout)        lane-dense output (W*Cout == 128)
    """
    n_blk, h, k = x_ref.shape
    wcout = o_ref.shape[2]
    lhs = x_ref[...].reshape(n_blk * h, k)
    acc = jnp.dot(lhs, w_ref[...], preferred_element_type=jnp.float32)
    acc = acc + b_ref[...]
    o_ref[...] = acc.reshape(n_blk, h, wcout)


def time_distributed_conv2d(input_seq, weight_oihw, bias):
    """TimeDistributed(Conv2d(kernel=3, padding=1)) forward.

    input_seq:   (B, T, Cin, H, W)    NCHW per time step (PyTorch convention)
    weight_oihw: (Cout, Cin, 3, 3)    PyTorch nn.Conv2d weight layout
    bias:        (Cout,)
    returns:     (B, T, Cout, H, W)
    """
    assert input_seq.ndim > 2
    size = input_seq.shape
    B, T = size[0], size[1]
    # [B*T] + rest, cast to float32 (exactly the PyTorch TimeDistributed forward)
    x = jnp.reshape(input_seq, (B * T,) + size[2:]).astype(jnp.float32)

    N, Cin, H, W = x.shape
    Cout = weight_oihw.shape[0]
    Wp = W + 2
    K = 3 * Wp * Cin
    WCout = W * Cout

    # --- input glue: NCHW -> NHWC, zero-pad, fold the 3 dy-taps into K -------
    x_nhwc = jnp.transpose(x, (0, 2, 3, 1))                    # (N, H, W, Cin)
    x_pad = jnp.pad(x_nhwc, ((0, 0), (1, 1), (1, 1), (0, 0)))  # (N, H+2, W+2, Cin)
    xv = x_pad.reshape(N, H + 2, Wp * Cin)
    # x_col[n, h, dy*Wp*Cin + wx*Cin + ci] == x_pad[n, h+dy, wx, ci]
    x_col = jnp.concatenate([xv[:, dy:dy + H, :] for dy in range(3)], axis=-1)

    # --- block-Toeplitz weight (K, W*Cout) ------------------------------------
    # w_big[dy*Wp*Cin + wx*Cin + ci, w*Cout + co] = w_hwio[dy, wx-w, ci, co]
    # (zero when wx-w is outside 0..2)
    w_hwio = jnp.transpose(weight_oihw.astype(jnp.float32), (2, 3, 1, 0))  # (3,3,Cin,Cout)
    dx = jnp.arange(Wp)[:, None] - jnp.arange(W)[None, :]                  # (Wp, W)
    valid = (dx >= 0) & (dx < 3)
    w_g = w_hwio[:, jnp.clip(dx, 0, 2), :, :]                              # (3,Wp,W,Cin,Cout)
    w_g = jnp.where(valid[None, :, :, None, None], w_g, 0.0)
    w_big = jnp.transpose(w_g, (0, 1, 3, 2, 4)).reshape(K, WCout)

    b_big = jnp.tile(bias.astype(jnp.float32), W).reshape(1, WCout)

    # --- grid: 2 parallel steps so both v7x TensorCores are busy --------------
    n_grid = 2 if (N % 2 == 0 and N >= 2) else 1
    n_blk = N // n_grid

    out = pl.pallas_call(
        _td_conv_kernel,
        out_shape=jax.ShapeDtypeStruct((N, H, WCout), jnp.float32),
        grid_spec=pltpu.PrefetchScalarGridSpec(
            num_scalar_prefetch=0,
            grid=(n_grid,),
            in_specs=[
                pl.BlockSpec((n_blk, H, K), lambda g: (g, 0, 0)),
                pl.BlockSpec((K, WCout), lambda g: (0, 0)),
                pl.BlockSpec((1, WCout), lambda g: (0, 0)),
            ],
            out_specs=pl.BlockSpec((n_blk, H, WCout), lambda g: (g, 0, 0)),
        ),
        compiler_params=pltpu.CompilerParams(
            dimension_semantics=("parallel",),
        ),
    )(x_col, w_big, b_big)

    # (N, H, W*Cout) -> (N, H, W, Cout) is a free contiguous reshape; then NCHW
    # and un-flatten the leading dim back to (B, T, ...).
    out_nchw = jnp.transpose(out.reshape(N, H, W, Cout), (0, 3, 1, 2))
    return jnp.reshape(out_nchw, (B, T, Cout, H, W))


if __name__ == "__main__":
    B, T, Cin, H, W = 2, 8, 4, 16, 16
    Cout = 8

    key = jax.random.PRNGKey(0)
    kx, kw, kb = jax.random.split(key, 3)

    x = jax.random.normal(kx, (B, T, Cin, H, W), dtype=jnp.float32)
    # Deterministic synthetic Conv2d parameters in the PyTorch OIHW layout.
    weight = 0.1 * jax.random.normal(kw, (Cout, Cin, 3, 3), dtype=jnp.float32)
    bias = 0.1 * jax.random.normal(kb, (Cout,), dtype=jnp.float32)

    out = jax.jit(time_distributed_conv2d)(x, weight, bias)
    jax.block_until_ready(out)

    assert out.shape == (B, T, Cout, H, W), out.shape
    assert out.dtype == jnp.float32

    # Cross-check against plain XLA conv with identical semantics.
    xf = x.reshape(B * T, Cin, H, W).astype(jnp.float32)
    ref = jax.lax.conv_general_dilated(
        xf, weight, window_strides=(1, 1), padding=((1, 1), (1, 1)),
        dimension_numbers=("NCHW", "OIHW", "NCHW"))
    ref = (ref + bias.reshape(1, Cout, 1, 1)).reshape(B, T, Cout, H, W)
    err = float(jnp.max(jnp.abs(out - ref)))
    assert err < 1e-4, err

    print("KERNEL_OK")
</pallas_src>

<mosaic_0001>
module attributes {stable_mosaic.version = 11 : i64} {
  func.func @_td_conv_kernel(%arg0: i32, %arg1: memref<8x16x216xf32, #tpu.memory_space<vmem>>, %arg2: memref<216x128xf32, #tpu.memory_space<vmem>>, %arg3: memref<1x128xf32, #tpu.memory_space<vmem>>, %arg4: memref<8x16x128xf32, #tpu.memory_space<vmem>>) attributes {dimension_semantics = [#tpu.dimension_semantics<parallel>], iteration_bounds = array<i64: 2>, scalar_prefetch = 0 : i64, scratch_operands = 0 : i64, tpu.core_type = #tpu.core_type<tc>, window_params = [{transform_indices = @transform_0, window_bounds = array<i64: 8, 16, 216>}, {pipeline_mode = #tpu.pipeline_mode<synchronous>, transform_indices = @transform_1, window_bounds = array<i64: 216, 128>}, {pipeline_mode = #tpu.pipeline_mode<synchronous>, transform_indices = @transform_2, window_bounds = array<i64: 1, 128>}, {transform_indices = @transform_3, window_bounds = array<i64: 8, 16, 128>}]} {
    %c0 = arith.constant 0 : index
    %c0_0 = arith.constant 0 : index
    %c0_1 = arith.constant 0 : index
    %0 = vector.load %arg1[%c0, %c0_0, %c0_1] : memref<8x16x216xf32, #tpu.memory_space<vmem>>, vector<8x16x216xf32>
    %1 = vector.shape_cast %0 : vector<8x16x216xf32> to vector<128x216xf32>
    %c0_2 = arith.constant 0 : index
    %c0_3 = arith.constant 0 : index
    %2 = vector.load %arg2[%c0_2, %c0_3] : memref<216x128xf32, #tpu.memory_space<vmem>>, vector<216x128xf32>
    %cst = arith.constant dense<0.000000e+00> : vector<128x128xf32>
    %3 = tpu.matmul %1, %2, %cst {dimension_numbers = #tpu.dot_dimension_numbers<[1], [0], [0], [1], [0, 0, 1, 1], [], []>} : vector<128x216xf32>, vector<216x128xf32>, vector<128x128xf32> -> vector<128x128xf32>
    %c0_4 = arith.constant 0 : index
    %c0_5 = arith.constant 0 : index
    %4 = vector.load %arg3[%c0_4, %c0_5] : memref<1x128xf32, #tpu.memory_space<vmem>>, vector<1x128xf32>
    %5 = vector.broadcast %4 : vector<1x128xf32> to vector<128x128xf32>
    %6 = arith.addf %3, %5 : vector<128x128xf32>
    %7 = vector.shape_cast %6 : vector<128x128xf32> to vector<8x16x128xf32>
    %c0_6 = arith.constant 0 : index
    %c0_7 = arith.constant 0 : index
    %c0_8 = arith.constant 0 : index
    %8 = vector.load %arg4[%c0_6, %c0_7, %c0_8] : memref<8x16x128xf32, #tpu.memory_space<vmem>>, vector<8x16x128xf32>
    tpu.vector_store %arg4[%c0_6, %c0_7, %c0_8], %7 {strides = array<i32>} : memref<8x16x128xf32, #tpu.memory_space<vmem>>, vector<8x16x128xf32>,
    return
  }
  func.func @transform_0(%arg0: i32) -> (i32, i32, i32) {
    %c0_i32 = arith.constant 0 : i32
    %c0_i32_0 = arith.constant 0 : i32
    %c0_i32_1 = arith.constant 0 : i32
    return %arg0, %c0_i32, %c0_i32_0 : i32, i32, i32
  }
  func.func @transform_1(%arg0: i32) -> (i32, i32) {
    %c0_i32 = arith.constant 0 : i32
    %c0_i32_0 = arith.constant 0 : i32
    %c0_i32_1 = arith.constant 0 : i32
    return %c0_i32, %c0_i32_0 : i32, i32
  }
  func.func @transform_2(%arg0: i32) -> (i32, i32) {
    %c0_i32 = arith.constant 0 : i32
    %c0_i32_0 = arith.constant 0 : i32
    %c0_i32_1 = arith.constant 0 : i32
    return %c0_i32, %c0_i32_0 : i32, i32
  }
  func.func @transform_3(%arg0: i32) -> (i32, i32, i32) {
    %c0_i32 = arith.constant 0 : i32
    %c0_i32_0 = arith.constant 0 : i32
    %c0_i32_1 = arith.constant 0 : i32
    return %arg0, %c0_i32, %c0_i32_0 : i32, i32, i32
  }
}

</mosaic_0001>

<llo_original>
// kernel: tile.8
$region0: #{tile.8}
  #allocation0 [shape = 's32[1]{0}', space=sflag, size = 0x4, scoped, tag = 'scoped memory for tile.8']
  %s0 = inlined_call_operand.vmem [shape: f32[8], index: 0, kind: input, shape index: {}]
  %s1 = inlined_call_operand.vmem [shape: f32[16,8], index: 1, kind: output, shape index: {}]
  // Predicated region
  $region2: #{tile.8} parent=0 // pred_check
    _
  $region3: #{tile.8} parent=0 // pred_check_branch
    %3 = sbr.rel (0) target = $region5
  $region4: #{tile.8} parent=0 // pred_region
    _
  $region5: #{tile.8} parent=0 // pred_fallthru
    _
  %v4 = vld [vmem:[%s0] ss:$0 sm:$0xff]
  %5 = vst [vmem:[%s1] sm:$0xff] %v4
  %s6 = scalar_lea.vmem %s1, 8
  %7 = vst [vmem:[%s6] sm:$0xff] %v4

// kernel: tile.9
$region0: #{tile.9}
  %s0 = inlined_call_operand.vmem [shape: f32[16,8], index: 0, kind: input, shape index: {}]
  %s1 = inlined_call_operand.vmem [shape: f32[1,128], index: 1, kind: output, shape index: {}]
  $region1: #{tile.9} parent=0
    #allocation0 [shape = 'u8[4096]{0}', space=vmem, size = 0x1000, scoped, tag = 'scoped mem for output reshape']
    %v2 = vld [vmem:[%s0] sm:$0x1]
    %vm3 = vcmask 64512
    %4 = vst.msk [vmem:[#allocation0] sm:$0x1] %vm3, %v2
    %s5 = scalar_lea.vmem %s0, 15
    %v6 = vld [vmem:[%s5] sm:$0x1]
    %7 = vrot.lane.b32.xlu0 %v6, 120
    %v8 = vpop.permute.xlu0 %7
    %vm9 = vcmask 1048512
    %10 = vst.msk [vmem:[#allocation0] sm:$0x1] %vm9, %v8
    %s11 = scalar_lea.vmem %s0, 14
    %v12 = vld [vmem:[%s11] sm:$0x1]
    %13 = vrot.lane.b32.xlu0 %v12, 112
    %v14 = vpop.permute.xlu0 %13
    %vm15 = vcmask 982912
    %16 = vst.msk [vmem:[#allocation0] sm:$0x1] %vm15, %v14
    %s17 = scalar_lea.vmem %s0, 13
    %v18 = vld [vmem:[%s17] sm:$0x1]
    %19 = vrot.lane.b32.xlu0 %v18, 104
    %v20 = vpop.permute.xlu0 %19
    %vm21 = vcmask 917312
    %22 = vst.msk [vmem:[#allocation0] sm:$0x1] %vm21, %v20
    %s23 = scalar_lea.vmem %s0, 12
    %v24 = vld [vmem:[%s23] sm:$0x1]
    %25 = vrot.lane.b32.xlu0 %v24, 96
    %v26 = vpop.permute.xlu0 %25
    %vm27 = vcmask 851712
    %28 = vst.msk [vmem:[#allocation0] sm:$0x1] %vm27, %v26
    %s29 = scalar_lea.vmem %s0, 11
    %v30 = vld [vmem:[%s29] sm:$0x1]
    %31 = vrot.lane.b32.xlu0 %v30, 88
    %v32 = vpop.permute.xlu0 %31
    %vm33 = vcmask 786112
    %34 = vst.msk [vmem:[#allocation0] sm:$0x1] %vm33, %v32
    %s35 = scalar_lea.vmem %s0, 10
    %v36 = vld [vmem:[%s35] sm:$0x1]
    %37 = vrot.lane.b32.xlu0 %v36, 80
    %v38 = vpop.permute.xlu0 %37
    %vm39 = vcmask 720512
    %40 = vst.msk [vmem:[#allocation0] sm:$0x1] %vm39, %v38
    %s41 = scalar_lea.vmem %s0, 9
    %v42 = vld [vmem:[%s41] sm:$0x1]
    %43 = vrot.lane.b32.xlu0 %v42, 72
    %v44 = vpop.permute.xlu0 %43
    %vm45 = vcmask 654912
    %46 = vst.msk [vmem:[#allocation0] sm:$0x1] %vm45, %v44
    %s47 = scalar_lea.vmem %s0, 8
    %v48 = vld [vmem:[%s47] sm:$0x1]
    %49 = vrot.lane.b32.xlu0 %v48, 64
    %v50 = vpop.permute.xlu0 %49
    %vm51 = vcmask 589312
    %52 = vst.msk [vmem:[#allocation0] sm:$0x1] %vm51, %v50
    %s53 = scalar_lea.vmem %s0, 7
    %v54 = vld [vmem:[%s53] sm:$0x1]
    %55 = vrot.lane.b32.xlu0 %v54, 56
    %v56 = vpop.permute.xlu0 %55
    %vm57 = vcmask 523712
    %58 = vst.msk [vmem:[#allocation0] sm:$0x1] %vm57, %v56
    %s59 = scalar_lea.vmem %s0, 6
    %v60 = vld [vmem:[%s59] sm:$0x1]
    %61 = vrot.lane.b32.xlu0 %v60, 48
    %v62 = vpop.permute.xlu0 %61
    %vm63 = vcmask 458112
    %64 = vst.msk [vmem:[#allocation0] sm:$0x1] %vm63, %v62
    %s65 = scalar_lea.vmem %s0, 5
    %v66 = vld [vmem:[%s65] sm:$0x1]
    %67 = vrot.lane.b32.xlu0 %v66, 40
    %v68 = vpop.permute.xlu0 %67
    %vm69 = vcmask 392512
    %70 = vst.msk [vmem:[#allocation0] sm:$0x1] %vm69, %v68
    %s71 = scalar_lea.vmem %s0, 4
    %v72 = vld [vmem:[%s71] sm:$0x1]
    %73 = vrot.lane.b32.xlu0 %v72, 32
    %v74 = vpop.permute.xlu0 %73
    %vm75 = vcmask 326912
    %76 = vst.msk [vmem:[#allocation0] sm:$0x1] %vm75, %v74
    %s77 = scalar_lea.vmem %s0, 3
    %v78 = vld [vmem:[%s77] sm:$0x1]
    %79 = vrot.lane.b32.xlu0 %v78, 24
    %v80 = vpop.permute.xlu0 %79
    %vm81 = vcmask 261312
    %82 = vst.msk [vmem:[#allocation0] sm:$0x1] %vm81, %v80
    %s83 = scalar_lea.vmem %s0, 2
    %v84 = vld [vmem:[%s83] sm:$0x1]
    %85 = vrot.lane.b32.xlu0 %v84, 16
    %v86 = vpop.permute.xlu0 %85
    %vm87 = vcmask 195712
    %88 = vst.msk [vmem:[#allocation0] sm:$0x1] %vm87, %v86
    %s89 = scalar_lea.vmem %s0, 1
    %v90 = vld [vmem:[%s89] sm:$0x1]
    %91 = vrot.lane.b32.xlu0 %v90, 8
    %v92 = vpop.permute.xlu0 %91
    %vm93 = vcmask 130112
    %94 = vst.msk [vmem:[#allocation0] sm:$0x1] %vm93, %v92
    %s96 = sshllo.u32 0, 1
    %v98 = vld [vmem:[#allocation0] sm:%s96]
    %s99 = sshllo.u32 0, 1
    %100 = vst [vmem:[%s1] sm:%s99] %v98

// kernel: time_distributed_conv2d.1
$region0: #{time_distributed_conv2d.1}
  #allocation0 [shape = 'u32[]', space=smem, size = 0x4, offset = 0x4, fixed_abs, tag = 'smem constant byte address 0x4 - core index']
  #allocation1 [shape = 'u32[144,128]{1,0:T(1,128)}', space=vmem, size = 0x12000, scoped, tag = 'internal scratch']
  %s0 = inlined_call_operand.vmem [shape: f32[16,16,216], index: 0, kind: input, shape index: {}]
  %s1 = inlined_call_operand.vmem [shape: f32[216,128], index: 1, kind: input, shape index: {}]
  %s2 = inlined_call_operand.vmem [shape: f32[1,128], index: 2, kind: input, shape index: {}]
  %s3 = inlined_call_operand.vmem [shape: f32[16,16,128], index: 3, kind: output, shape index: {}]
  %s4 = sld [smem:[#allocation0]]
  $region45: #{time_distributed_conv2d.1} parent=0
    _
  %s6 = ssub.s32 1, %s4
  %s7 = scalar_select 0, %s6, %s4
  loop: start=0, step=1, limit=4
  $region2: #{time_distributed_conv2d.1} parent=0 // loop_pre_header
    _
  $region3: #{time_distributed_conv2d.1} parent=0 // loop_header
    %s9 = sphi 0, %s13
    %p10 = scmp.ge.s32.totalorder %s9, 4
    %s19 = sphi 0, %s21
    %s22 = sphi 0, %s19
    %s23 = sphi 0, %s22
    %s39 = sphi 0, %s23
    %s43 = sphi 0, %s43
    %s45 = sphi 0, %s43
    %s46 = sphi 0, %s45
    %s60 = sphi 0, %s46
    %s64 = sphi 0, %s64
    %s66 = sphi 0, %s64
    %s67 = sphi 0, %s66
    %s81 = sphi 0, %s67
    %s87 = sphi 0, %s89
    %s90 = sphi 0, %s87
    %s91 = sphi 0, %s90
    %s107 = sphi 0, %s91
  $region4: #{time_distributed_conv2d.1} parent=0 // loop_header_branch
    %12 = sbr.rel (%p10) target = $region8
  $region5: #{time_distributed_conv2d.1} parent=0 // loop_body
    %s14 = ssub.s32 %s9, 1
    %s15 = ssub.s32 %s9, 2
    %s16 = sadd.s32 %s9, 1
    %s17 = ssub.s32 %s9, %s16
    %p18 = scmp.eq.s32.totalorder %s17, 0
    %s20 = sadd.s32 %s19, 1
    %s21 = scalar_select %p18, %s19, %s20
    %p24 = pneg %p18
    %p25 = scmp.eq.s32.totalorder %s9, 1
    %p26 = por %p24, %p25
    %p27 = scmp.ne.s32.totalorder %s19, %s22
    %p28 = scmp.eq.s32.totalorder %s9, 0
    %p29 = por %p27, %p28
    %p30 = scmp.ne.s32.totalorder %s19, %s22
    %p31 = scmp.eq.s32.totalorder %s14, 1
    %p32 = por %p30, %p31
    %p33 = scmp.ne.s32.totalorder %s22, %s23
    %p34 = scmp.eq.s32.totalorder %s14, 0
    %p35 = por %p33, %p34
    %p36 = scmp.ne.s32.totalorder %s22, %s23
    %p37 = scmp.eq.s32.totalorder %s15, 1
    %p38 = por %p36, %p37
    %p40 = scmp.ne.s32.totalorder %s23, %s39
    %p41 = scmp.eq.s32.totalorder %s15, 0
    %p42 = por %p40, %p41
    %s44 = sadd.s32 %s43, 1
    %p47 = scmp.eq.s32.totalorder %s9, 1
    %p48 = scmp.ne.s32.totalorder %s43, %s45
    %p49 = scmp.eq.s32.totalorder %s9, 0
    %p50 = por %p48, %p49
    %p51 = scmp.ne.s32.totalorder %s43, %s45
    %p52 = scmp.eq.s32.totalorder %s14, 1
    %p53 = por %p51, %p52
    %p54 = scmp.ne.s32.totalorder %s45, %s46
    %p55 = scmp.eq.s32.totalorder %s14, 0
    %p56 = por %p54, %p55
    %p57 = scmp.ne.s32.totalorder %s45, %s46
    %p58 = scmp.eq.s32.totalorder %s15, 1
    %p59 = por %p57, %p58
    %p61 = scmp.ne.s32.totalorder %s46, %s60
    %p62 = scmp.eq.s32.totalorder %s15, 0
    %p63 = por %p61, %p62
    %s65 = sadd.s32 %s64, 1
    %p68 = scmp.eq.s32.totalorder %s9, 1
    %p69 = scmp.ne.s32.totalorder %s64, %s66
    %p70 = scmp.eq.s32.totalorder %s9, 0
    %p71 = por %p69, %p70
    %p72 = scmp.ne.s32.totalorder %s64, %s66
    %p73 = scmp.eq.s32.totalorder %s14, 1
    %p74 = por %p72, %p73
    %p75 = scmp.ne.s32.totalorder %s66, %s67
    %p76 = scmp.eq.s32.totalorder %s14, 0
    %p77 = por %p75, %p76
    %p78 = scmp.ne.s32.totalorder %s66, %s67
    %p79 = scmp.eq.s32.totalorder %s15, 1
    %p80 = por %p78, %p79
    %p82 = scmp.ne.s32.totalorder %s67, %s81
    %p83 = scmp.eq.s32.totalorder %s15, 0
    %p84 = por %p82, %p83
    %s85 = ssub.s32 %s9, %s16
    %p86 = scmp.eq.s32.totalorder %s85, 0
    %s88 = sadd.s32 %s87, 1
    %s89 = scalar_select %p86, %s87, %s88
    %p92 = pneg %p86
    %p93 = scmp.eq.s32.totalorder %s9, 1
    %p94 = por %p92, %p93
    %p95 = scmp.ne.s32.totalorder %s87, %s90
    %p96 = scmp.eq.s32.totalorder %s9, 0
    %p97 = por %p95, %p96
    %p98 = scmp.ne.s32.totalorder %s87, %s90
    %p99 = scmp.eq.s32.totalorder %s14, 1
    %p100 = por %p98, %p99
    %p101 = scmp.ne.s32.totalorder %s90, %s91
    %p102 = scmp.eq.s32.totalorder %s14, 0
    %p103 = por %p101, %p102
    %p104 = scmp.ne.s32.totalorder %s90, %s91
    %p105 = scmp.eq.s32.totalorder %s15, 1
    %p106 = por %p104, %p105
    %p108 = scmp.ne.s32.totalorder %s91, %s107
    %p109 = scmp.eq.s32.totalorder %s15, 0
    %p110 = por %p108, %p109
    %p111 = scmp.le.s32.totalorder 1, %s9
    %p112 = scmp.lt.s32.totalorder %s9, 3
    %p113 = pnand %p111, %p112
    %p114 = pneg %p113
    // Predicated region
    $region9: #{time_distributed_conv2d.1} parent=5 // pred_check
      _
    $region10: #{time_distributed_conv2d.1} parent=5 // pred_check_branch
      %116 = sbr.rel (%p113) target = $region12
    $region11: #{time_distributed_conv2d.1} parent=5 // pred_region
      %s117 = ssub.s32 %s9, 1
      // Predicated region
      $region13: #{time_distributed_conv2d.1} parent=11 // pred_check
        %p118 = pneg %p56
      $region14: #{time_distributed_conv2d.1} parent=11 // pred_check_branch
        %120 = sbr.rel (%p118) target = $region16
      $region15: #{time_distributed_conv2d.1} parent=11 // pred_region
        _
      $region16: #{time_distributed_conv2d.1} parent=11 // pred_fallthru
        _
      // Predicated region
      $region17: #{time_distributed_conv2d.1} parent=11 // pred_check
        %p121 = pneg %p77
      $region18: #{time_distributed_conv2d.1} parent=11 // pred_check_branch
        %123 = sbr.rel (%p121) target = $region20
      $region19: #{time_distributed_conv2d.1} parent=11 // pred_region
        _
      $region20: #{time_distributed_conv2d.1} parent=11 // pred_fallthru
        _
    $region12: #{time_distributed_conv2d.1} parent=5 // pred_fallthru
      _
    %p124 = scmp.lt.s32.totalorder %s9, 2
    // Predicated region
    $region21: #{time_distributed_conv2d.1} parent=5 // pred_check
      %p125 = pneg %p124
    $region22: #{time_distributed_conv2d.1} parent=5 // pred_check_branch
      %127 = sbr.rel (%p125) target = $region24
    $region23: #{time_distributed_conv2d.1} parent=5 // pred_region
      // Predicated region
      $region25: #{time_distributed_conv2d.1} parent=23 // pred_check
        %p128 = pneg %p29
      $region26: #{time_distributed_conv2d.1} parent=23 // pred_check_branch
        %130 = sbr.rel (%p128) target = $region28
      $region27: #{time_distributed_conv2d.1} parent=23 // pred_region
        %s131 = smul.u32 8, %s9
        %p132 = scmp.lt.s32.totalorder %s131, 15
        %s133 = scalar_select %p132, %s131, 15
        %s134 = smul.addr %s133, 4
        %s135 = smul.addr %s134, 8
        %s136 = scalar_lea.vmem %s0, %s135
        %s137 = smul.u32 8, %s9
      $region28: #{time_distributed_conv2d.1} parent=23 // pred_fallthru
        _
    $region24: #{time_distributed_conv2d.1} parent=5 // pred_fallthru
      _
    %p138 = scmp.le.s32.totalorder 1, %s9
    %p139 = scmp.lt.s32.totalorder %s9, 3
    %p140 = pnand %p138, %p139
    %p141 = pneg %p140
    // Predicated region
    $region29: #{time_distributed_conv2d.1} parent=5 // pred_check
      _
    $region30: #{time_distributed_conv2d.1} parent=5 // pred_check_branch
      %143 = sbr.rel (%p140) target = $region32
    $region31: #{time_distributed_conv2d.1} parent=5 // pred_region
      %s144 = ssub.s32 %s9, 1
      %s145 = smul.u32 8, %s14
      %p146 = scmp.lt.s32.totalorder %s145, 15
      %s147 = scalar_select %p146, %s145, 15
      %s148 = smul.addr %s147, 4
      %s149 = smul.addr %s148, 8
      %s150 = scalar_lea.vmem %s0, %s149
      %p151 = pneg %p35
      %p152 = pneg %p32
      %p153 = pneg %p56
      %p154 = pneg %p53
      %p155 = pneg %p77
      %p156 = pneg %p74
      %p157 = pneg %p103
      %p158 = pneg %p100
      %s159 = smul.u32 8, %s14
      %p160 = scmp.lt.s32.totalorder %s159, 15
      %s161 = scalar_select %p160, %s159, 15
      %s162 = smul.addr %s161, 2
      %s163 = smul.addr %s162, 8
      %s164 = scalar_lea.vmem %s3, %s163
      %s165 = smul.u32 8, %s14
      %p166 = scmp.lt.s32.totalorder %s165, 15
      %s167 = scalar_select %p166, %s165, 15
      %s168 = smul.addr %s167, 4
      %s169 = smul.addr %s168, 8
      %s170 = scalar_lea.vmem %s0, %s169
      %s171 = smul.u32 8, %s14
      %s172 = smul.u32 8, %s14
      %p173 = scmp.lt.s32.totalorder %s172, 15
      %s174 = scalar_select %p173, %s172, 15
      %s175 = smul.addr %s174, 2
      %s176 = smul.addr %s175, 8
      %s177 = scalar_lea.vmem %s3, %s176
      %s178 = smul.u32 8, %s14
      %v179 = vld [vmem:[%s170] sm:$0xff]
      %v180 = vld [vmem:[%s170 + $0x8] sm:$0xff]
      %v181 = vld [vmem:[%s170 + $0x10] sm:$0xff]
      %v182 = vld [vmem:[%s170 + $0x18] sm:$0xff]
      %v183 = vld [vmem:[%s170 + $0x20] sm:$0xff]
      %v184 = vld [vmem:[%s170 + $0x28] sm:$0xff]
      %v185 = vld [vmem:[%s170 + $0x30] sm:$0xff]
      %v186 = vld [vmem:[%s170 + $0x38] sm:$0xff]
      %v187 = vld [vmem:[%s170 + $0x40] sm:$0xff]
      %v188 = vld [vmem:[%s170 + $0x48] sm:$0xff]
      %v189 = vld [vmem:[%s170 + $0x50] sm:$0xff]
      %v190 = vld [vmem:[%s170 + $0x58] sm:$0xff]
      %v191 = vld [vmem:[%s170 + $0x60] sm:$0xff]
      %v192 = vld [vmem:[%s170 + $0x68] sm:$0xff]
      %v193 = vld [vmem:[%s170 + $0x70] sm:$0xff]
      %v194 = vld [vmem:[%s170 + $0x78] sm:$0xff]
      %v195 = vld [vmem:[%s170 + $0x80] sm:$0xff]
      %v196 = vld [vmem:[%s170 + $0x88] sm:$0xff]
      %v197 = vld [vmem:[%s170 + $0x90] sm:$0xff]
      %v198 = vld [vmem:[%s170 + $0x98] sm:$0xff]
      %v199 = vld [vmem:[%s170 + $0xa0] sm:$0xff]
      %v200 = vld [vmem:[%s170 + $0xa8] sm:$0xff]
      %v201 = vld [vmem:[%s170 + $0xb0] sm:$0xff]
      %v202 = vld [vmem:[%s170 + $0xb8] sm:$0xff]
      %v203 = vld [vmem:[%s170 + $0xc0] sm:$0xff]
      %v204 = vld [vmem:[%s170 + $0xc8] sm:$0xff]
      %v205 = vld [vmem:[%s170 + $0xd0] sm:$0xff]
      %v206 = vld [vmem:[%s170 + $0xd8] sm:$0xff]
      %v207 = vld [vmem:[%s170 + $0xe0] sm:$0xff]
      %v208 = vld [vmem:[%s170 + $0xe8] sm:$0xff]
      %v209 = vld [vmem:[%s170 + $0xf0] sm:$0xff]
      %v210 = vld [vmem:[%s170 + $0xf8] sm:$0xff]
      %v211 = vld [vmem:[%s1] sm:$0xff]
      %v212 = vld [vmem:[%s1 + $0x8] sm:$0xff]
      %v213 = vld [vmem:[%s1 + $0x10] sm:$0xff]
      %v214 = vld [vmem:[%s1 + $0x18] sm:$0xff]
      %v215 = vld [vmem:[%s1 + $0x20] sm:$0xff]
      %v216 = vld [vmem:[%s1 + $0x28] sm:$0xff]
      %v217 = vld [vmem:[%s1 + $0x30] sm:$0xff]
      %v218 = vld [vmem:[%s1 + $0x38] sm:$0xff]
      %v219 = vld [vmem:[%s1 + $0x40] sm:$0xff]
      %v220 = vld [vmem:[%s1 + $0x48] sm:$0xff]
      %v221 = vld [vmem:[%s1 + $0x50] sm:$0xff]
      %v222 = vld [vmem:[%s1 + $0x58] sm:$0xff]
      %v223 = vld [vmem:[%s1 + $0x60] sm:$0xff]
      %v224 = vld [vmem:[%s1 + $0x68] sm:$0xff]
      %v225 = vld [vmem:[%s1 + $0x70] sm:$0xff]
      %v226 = vld [vmem:[%s1 + $0x78] sm:$0xff]
      %v227 = vld [vmem:[%s1 + $0x80] sm:$0xff]
      %v228 = vld [vmem:[%s1 + $0x88] sm:$0xff]
      %v229 = vld [vmem:[%s1 + $0x90] sm:$0xff]
      %v230 = vld [vmem:[%s1 + $0x98] sm:$0xff]
      %v231 = vld [vmem:[%s1 + $0xa0] sm:$0xff]
      %v232 = vld [vmem:[%s1 + $0xa8] sm:$0xff]
      %v233 = vld [vmem:[%s1 + $0xb0] sm:$0xff]
      %v234 = vld [vmem:[%s1 + $0xb8] sm:$0xff]
      %v235 = vld [vmem:[%s1 + $0xc0] sm:$0xff]
      %v236 = vld [vmem:[%s1 + $0xc8] sm:$0xff]
      %v237 = vld [vmem:[%s1 + $0xd0] sm:$0xff]
      %v238 = vld [vmem:[%s2] sm:$0x1]
      %v240 = vlaneseq
      %v241 = vshrl.u32 %v240, 7
      %v242 = vsub.s32 0, %v241
      %v243 = vrot.slane %v238, %v242
      %vm245 = vcmask 719872
      %v247 = vsel %vm245, %v180, 0
      %v250 = vsel %vm245, %v182, 0
      %v253 = vsel %vm245, %v184, 0
      %v256 = vsel %vm245, %v186, 0
      %v259 = vsel %vm245, %v188, 0
      %v262 = vsel %vm245, %v190, 0
      %v265 = vsel %vm245, %v192, 0
      %v268 = vsel %vm245, %v194, 0
      %v271 = vsel %vm245, %v196, 0
      %v274 = vsel %vm245, %v198, 0
      %v277 = vsel %vm245, %v200, 0
      %v280 = vsel %vm245, %v202, 0
      %v283 = vsel %vm245, %v204, 0
      %v286 = vsel %vm245, %v206, 0
      %v289 = vsel %vm245, %v208, 0
      %v292 = vsel %vm245, %v210, 0
      %294 = vmatprep.subr.mxu0 0.0
      %295 = vmatpush1.msra.mxu0 %v211
      %296 = vmatprep.subr.mxu0 0.0
      %297 = vmatpush1.msra.mxu0 %v212
      %298 = vmatprep.subr.mxu0 0.0
      %299 = vmatpush1.msra.mxu0 %v213
      %300 = vmatprep.subr.mxu0 0.0
      %301 = vmatpush1.msra.mxu0 %v214
      %302 = vmatprep.subr.mxu0 0.0
      %303 = vmatpush1.msra.mxu0 %v215
      %304 = vmatprep.subr.mxu0 0.0
      %305 = vmatpush1.msra.mxu0 %v216
      %306 = vmatprep.subr.mxu0 0.0
      %307 = vmatpush1.msra.mxu0 %v217
      %308 = vmatprep.subr.mxu0 0.0
      %309 = vmatpush1.msra.mxu0 %v218
      %310 = vmatprep.subr.mxu0 0.0
      %311 = vmatpush1.msra.mxu0 %v219
      %312 = vmatprep.subr.mxu0 0.0
      %313 = vmatpush1.msra.mxu0 %v220
      %314 = vmatprep.subr.mxu0 0.0
      %315 = vmatpush1.msra.mxu0 %v221
      %316 = vmatprep.subr.mxu0 0.0
      %317 = vmatpush1.msra.mxu0 %v222
      %318 = vmatprep.subr.mxu0 0.0
      %319 = vmatpush1.msra.mxu0 %v223
      %320 = vmatprep.subr.mxu0 0.0
      %321 = vmatpush1.msra.mxu0 %v224
      %322 = vmatprep.subr.mxu0 0.0
      %323 = vmatpush1.msra.mxu0 %v225
      %324 = vmatprep.subr.mxu0 0.0
      %325 = vmatpush1.msra.mxu0 %v226
      %326 = vmatprep.subr.mxu0 0.0
      %327 = vmatpush1.msra.mxu0 %v227
      %328 = vmatprep.subr.mxu0 0.0
      %329 = vmatpush1.msra.mxu0 %v228
      %330 = vmatprep.subr.mxu0 0.0
      %331 = vmatpush1.msra.mxu0 %v229
      %332 = vmatprep.subr.mxu0 0.0
      %333 = vmatpush1.msra.mxu0 %v230
      %334 = vmatprep.subr.mxu0 0.0
      %335 = vmatpush1.msra.mxu0 %v231
      %336 = vmatprep.subr.mxu0 0.0
      %337 = vmatpush1.msra.mxu0 %v232
      %338 = vmatprep.subr.mxu0 0.0
      %339 = vmatpush1.msra.mxu0 %v233
      %340 = vmatprep.subr.mxu0 0.0
      %341 = vmatpush1.msra.mxu0 %v234
      %342 = vmatprep.subr.mxu0 0.0
      %343 = vmatpush1.msra.mxu0 %v235
      %344 = vmatprep.subr.mxu0 0.0
      %345 = vmatpush1.msra.mxu0 %v236
      %346 = vmatprep.subr.mxu0 0.0
      %347 = vmatpush1.msra.mxu0 %v237
      %348 = vmatprep.subr.mxu0 0.0
      %349 = vmatpush1.msra.mxu0 0.0
      %350 = vmatprep.subr.mxu0 0.0
      %351 = vmatpush1.msra.mxu0 0.0
      %352 = vmatprep.subr.mxu0 0.0
      %353 = vmatpush1.msra.mxu0 0.0
      %354 = vmatprep.subr.mxu0 0.0
      %355 = vmatpush1.msra.mxu0 0.0
      %356 = vmatprep.subr.mxu0 0.0
      %357 = vmatpush1.msra.mxu0 0.0
      %358 = vmatprep.mubr.f32.mxu0 %v247
      %359 = vmatmul.mubr.f32.gmra.mrb[0].mxu0 %v179
      %v360 = vpop.f32.mrb[0].mxu0
      %v361 = vadd.f32 %v243, %v360
      %v362 = vpop.f32.mrb[0].mxu0
      %363 = vmatprep.mubr.f32.mxu0 %v250
      %364 = vmatmul.mubr.f32.gmra.mrb[0].mxu0 %v181
      %v365 = vpop.f32.mrb[0].mxu0
      %v366 = vadd.f32 %v243, %v365
      %v367 = vpop.f32.mrb[0].mxu0
      %368 = vmatprep.mubr.f32.mxu0 %v253
      %369 = vmatmul.mubr.f32.gmra.mrb[0].mxu0 %v183
      %v370 = vpop.f32.mrb[0].mxu0
      %v371 = vadd.f32 %v243, %v370
      %v372 = vpop.f32.mrb[0].mxu0
      %373 = vmatprep.mubr.f32.mxu0 %v256
      %374 = vmatmul.mubr.f32.gmra.mrb[0].mxu0 %v185
      %v375 = vpop.f32.mrb[0].mxu0
      %v376 = vadd.f32 %v243, %v375
      %v377 = vpop.f32.mrb[0].mxu0
      %378 = vmatprep.mubr.f32.mxu0 %v259
      %379 = vmatmul.mubr.f32.gmra.mrb[0].mxu0 %v187
      %v380 = vpop.f32.mrb[0].mxu0
      %v381 = vadd.f32 %v243, %v380
      %v382 = vpop.f32.mrb[0].mxu0
      %383 = vmatprep.mubr.f32.mxu0 %v262
      %384 = vmatmul.mubr.f32.gmra.mrb[0].mxu0 %v189
      %v385 = vpop.f32.mrb[0].mxu0
      %v386 = vadd.f32 %v243, %v385
      %v387 = vpop.f32.mrb[0].mxu0
      %388 = vmatprep.mubr.f32.mxu0 %v265
      %389 = vmatmul.mubr.f32.gmra.mrb[0].mxu0 %v191
      %v390 = vpop.f32.mrb[0].mxu0
      %v391 = vadd.f32 %v243, %v390
      %v392 = vpop.f32.mrb[0].mxu0
      %393 = vmatprep.mubr.f32.mxu0 %v268
      %394 = vmatmul.mubr.f32.gmra.mrb[0].mxu0 %v193
      %v395 = vpop.f32.mrb[0].mxu0
      %v396 = vadd.f32 %v243, %v395
      %v397 = vpop.f32.mrb[0].mxu0
      %398 = vmatprep.mubr.f32.mxu0 %v271
      %399 = vmatmul.mubr.f32.gmra.mrb[0].mxu0 %v195
      %v400 = vpop.f32.mrb[0].mxu0
      %v401 = vadd.f32 %v243, %v400
      %v402 = vpop.f32.mrb[0].mxu0
      %403 = vmatprep.mubr.f32.mxu0 %v274
      %404 = vmatmul.mubr.f32.gmra.mrb[0].mxu0 %v197
      %v405 = vpop.f32.mrb[0].mxu0
      %v406 = vadd.f32 %v243, %v405
      %v407 = vpop.f32.mrb[0].mxu0
      %408 = vmatprep.mubr.f32.mxu0 %v277
      %409 = vmatmul.mubr.f32.gmra.mrb[0].mxu0 %v199
      %v410 = vpop.f32.mrb[0].mxu0
      %v411 = vadd.f32 %v243, %v410
      %v412 = vpop.f32.mrb[0].mxu0
      %413 = vmatprep.mubr.f32.mxu0 %v280
      %414 = vmatmul.mubr.f32.gmra.mrb[0].mxu0 %v201
      %v415 = vpop.f32.mrb[0].mxu0
      %v416 = vadd.f32 %v243, %v415
      %v417 = vpop.f32.mrb[0].mxu0
      %418 = vmatprep.mubr.f32.mxu0 %v283
      %419 = vmatmul.mubr.f32.gmra.mrb[0].mxu0 %v203
      %v420 = vpop.f32.mrb[0].mxu0
      %v421 = vadd.f32 %v243, %v420
      %v422 = vpop.f32.mrb[0].mxu0
      %423 = vmatprep.mubr.f32.mxu0 %v286
      %424 = vmatmul.mubr.f32.gmra.mrb[0].mxu0 %v205
      %v425 = vpop.f32.mrb[0].mxu0
      %v426 = vadd.f32 %v243, %v425
      %v427 = vpop.f32.mrb[0].mxu0
      %428 = vmatprep.mubr.f32.mxu0 %v289
      %429 = vmatmul.mubr.f32.gmra.mrb[0].mxu0 %v207
      %v430 = vpop.f32.mrb[0].mxu0
      %v431 = vadd.f32 %v243, %v430
      %v432 = vpop.f32.mrb[0].mxu0
      %433 = vmatprep.mubr.f32.mxu0 %v292
      %434 = vmatmul.mubr.f32.gmra.mrb[0].mxu0 %v209
      %v435 = vpop.f32.mrb[0].mxu0
      %v436 = vadd.f32 %v243, %v435
      %v437 = vpop.f32.mrb[0].mxu0
      %438 = vdwg.mxu0
      %439 = vst [vmem:[%s177] sm:$0xff] %v361
      %440 = vst [vmem:[%s177 + $0x8] sm:$0xff] %v366
      %441 = vst [vmem:[%s177 + $0x10] sm:$0xff] %v371
      %442 = vst [vmem:[%s177 + $0x18] sm:$0xff] %v376
      %443 = vst [vmem:[%s177 + $0x20] sm:$0xff] %v381
      %444 = vst [vmem:[%s177 + $0x28] sm:$0xff] %v386
      %445 = vst [vmem:[%s177 + $0x30] sm:$0xff] %v391
      %446 = vst [vmem:[%s177 + $0x38] sm:$0xff] %v396
      %447 = vst [vmem:[%s177 + $0x40] sm:$0xff] %v401
      %448 = vst [vmem:[%s177 + $0x48] sm:$0xff] %v406
      %449 = vst [vmem:[%s177 + $0x50] sm:$0xff] %v411
      %450 = vst [vmem:[%s177 + $0x58] sm:$0xff] %v416
      %451 = vst [vmem:[%s177 + $0x60] sm:$0xff] %v421
      %452 = vst [vmem:[%s177 + $0x68] sm:$0xff] %v426
      %453 = vst [vmem:[%s177 + $0x70] sm:$0xff] %v431
      %454 = vst [vmem:[%s177 + $0x78] sm:$0xff] %v436
      %s455 = smul.u32 8, %s14
      %p456 = scmp.lt.s32.totalorder %s455, 15
      %s457 = scalar_select %p456, %s455, 15
      %s458 = smul.addr %s457, 2
      %s459 = smul.addr %s458, 8
      %s460 = scalar_lea.vmem %s3, %s459
      // Predicated region
      $region33: #{time_distributed_conv2d.1} parent=31 // pred_check
        %p461 = pneg %p100
      $region34: #{time_distributed_conv2d.1} parent=31 // pred_check_branch
        %463 = sbr.rel (%p461) target = $region36
      $region35: #{time_distributed_conv2d.1} parent=31 // pred_region
        %s464 = smul.u32 8, %s14
      $region36: #{time_distributed_conv2d.1} parent=31 // pred_fallthru
        _
    $region32: #{time_distributed_conv2d.1} parent=5 // pred_fallthru
      _
    %p465 = scmp.le.s32.totalorder 2, %s9
    // Predicated region
    $region37: #{time_distributed_conv2d.1} parent=5 // pred_check
      %p466 = pneg %p465
    $region38: #{time_distributed_conv2d.1} parent=5 // pred_check_branch
      %468 = sbr.rel (%p466) target = $region40
    $region39: #{time_distributed_conv2d.1} parent=5 // pred_region
      %s469 = ssub.s32 %s9, 2
      // Predicated region
      $region41: #{time_distributed_conv2d.1} parent=39 // pred_check
        %p470 = pneg %p106
      $region42: #{time_distributed_conv2d.1} parent=39 // pred_check_branch
        %472 = sbr.rel (%p470) target = $region44
      $region43: #{time_distributed_conv2d.1} parent=39 // pred_region
        %s473 = smul.u32 8, %s15
        %p474 = scmp.lt.s32.totalorder %s473, 15
        %s475 = scalar_select %p474, %s473, 15
        %s476 = smul.addr %s475, 2
        %s477 = smul.addr %s476, 8
        %s478 = scalar_lea.vmem %s3, %s477
      $region44: #{time_distributed_conv2d.1} parent=39 // pred_fallthru
        _
    $region40: #{time_distributed_conv2d.1} parent=5 // pred_fallthru
      _
  $region6: #{time_distributed_conv2d.1} parent=0 // loop_footer
    %s13 = sadd.s32 1, %s9
  $region7: #{time_distributed_conv2d.1} parent=0 // loop_footer_branch
    %8 = sbr.rel target = $region3
  $region8: #{time_distributed_conv2d.1} parent=0 // loop_exit
    _

</llo_original>
